<compile_context>
chip_gen: v6e
topology: v6e:2x2x1
jax: 0.10.0
libtpu: 0.0.40
codegen_flags: <defaults>
</compile_context>

<pallas_src>
import jax
import jax.numpy as jnp
from jax.experimental import pallas as pl
from jax.experimental.pallas import tpu as pltpu

NUM_REWARD_FEATS = 8
NAME_EMBEDDING_SIZE = 32          # FeatureNameEmbeddings default
HIDDEN_SIZE = 128                 # LocalizedRewardEncoder default
PER_FEAT_OUTPUT_SIZE = 64         # LocalizedRewardEncoder default
DROPOUT_P = 0.4                   # eval mode => identity


def _round_up(x, mult):
    return ((x + mult - 1) // mult) * mult


def _encoder_kernel(rw_ref, c_ref, v_ref, w2_ref, b2_ref, o_ref):
    """One M-tile of the fused per-feature 2-layer MLP.

    rw_ref : (TM, F)        reward-weight tile (the only batch-dependent input)
    c_ref  : (F, 1, H)      c_f = emb_f @ W1_f[:D, :] + b1_f   (batch-invariant)
    v_ref  : (F, 1, H)      v_f = W1_f[D, :]  (row multiplying the scalar reward weight)
    w2_ref : (F, H, Dout)   second Linear weights (transposed vs. torch layout)
    b2_ref : (F, 1, Dout)
    o_ref  : (TM, F*Dout)   lane-dense output tile (feature-major along lanes)
    """
    num_feats = v_ref.shape[0]
    outs = []
    for f in range(num_feats):                      # small fixed trip count -> unrolled
        rw_f = rw_ref[:, f:f + 1]                   # (TM, 1)
        # Layer 1 (+ ReLU): exact split of cat([emb_f, rw_f]) @ W1_f^T + b1_f.
        h = jnp.maximum(rw_f * v_ref[f] + c_ref[f], 0.0)            # (TM, H)
        # Dropout (eval mode) == identity.
        y = jnp.dot(h, w2_ref[f],
                    preferred_element_type=jnp.float32) + b2_ref[f]  # (TM, Dout)
        outs.append(y)
    # Single lane-dense store (F*Dout = multiple of 128) instead of F masked ones.
    o_ref[...] = jnp.concatenate(outs, axis=-1).astype(o_ref.dtype)


def _reference_forward(reward_weights, emb, w1_t, b1, w2_t, b2):
    """Plain-JAX reference / XLA-fused fallback (matches the PyTorch forward)."""
    batch = reward_weights.shape[0]
    num_feats, d = emb.shape
    x = jnp.concatenate(
        [jnp.broadcast_to(emb[None], (batch, num_feats, d)),
         reward_weights[..., None]], axis=-1)                         # (B, F, D+1)
    h = jnp.maximum(jnp.einsum("bfi,fih->bfh", x, w1_t) + b1[None], 0.0)
    return jnp.einsum("bfh,fho->bfo", h, w2_t) + b2[None]


def localized_reward_encoder_forward(reward_weights, emb, w1_t, b1, w2_t, b2,
                                     *, block_m=512, min_rows_for_pallas=1024,
                                     force_pallas=False):
    """reward_weights: (batch, F) f32
       emb:  (F, D)        name embeddings (D = NAME_EMBEDDING_SIZE)
       w1_t: (F, D+1, H)   layer-1 weights, transposed vs torch (in, out)
       b1:   (F, H)
       w2_t: (F, H, Dout)  layer-2 weights, transposed vs torch
       b2:   (F, Dout)
       returns: (batch, F, Dout)
    """
    batch, num_feats = reward_weights.shape
    d = emb.shape[1]
    hidden = w1_t.shape[2]
    dout = w2_t.shape[2]

    # Tiny problems: pallas_call launch + per-step overhead dwarfs the work;
    # let XLA fuse it (perf-review dispatch threshold).
    if batch < min_rows_for_pallas and not force_pallas:
        return _reference_forward(reward_weights, emb, w1_t, b1, w2_t, b2)

    # Fold the batch-invariant embedding contribution of layer 1 into c_f.
    c = jnp.einsum("fd,fdh->fh", emb, w1_t[:, :d, :]) + b1            # (F, H)
    v = w1_t[:, d, :]                                                 # (F, H)
    c3 = c.reshape(num_feats, 1, hidden)
    v3 = v.reshape(num_feats, 1, hidden)
    b2_3 = b2.reshape(num_feats, 1, dout)

    # M-tiling (keeps VMEM bounded on v7x and enables pipelining).
    tm = min(block_m, _round_up(batch, 8))
    m_pad = _round_up(batch, tm)
    rw = reward_weights
    if m_pad != batch:
        rw = jnp.pad(rw, ((0, m_pad - batch), (0, 0)))

    out2d = pl.pallas_call(
        _encoder_kernel,
        out_shape=jax.ShapeDtypeStruct((m_pad, num_feats * dout),
                                       reward_weights.dtype),
        grid_spec=pltpu.PrefetchScalarGridSpec(
            num_scalar_prefetch=0,
            grid=(m_pad // tm,),
            in_specs=[
                pl.BlockSpec((tm, num_feats), lambda i: (i, 0)),
                # Weights / constants grid-resident: fetched once.
                pl.BlockSpec((num_feats, 1, hidden), lambda i: (0, 0, 0)),
                pl.BlockSpec((num_feats, 1, hidden), lambda i: (0, 0, 0)),
                pl.BlockSpec((num_feats, hidden, dout), lambda i: (0, 0, 0)),
                pl.BlockSpec((num_feats, 1, dout), lambda i: (0, 0, 0)),
            ],
            out_specs=pl.BlockSpec((tm, num_feats * dout), lambda i: (i, 0)),
        ),
        compiler_params=pltpu.CompilerParams(
            # Independent M tiles -> shard across both TensorCores on v7x.
            dimension_semantics=("parallel",)),
    )(rw, c3, v3, w2_t, b2_3)

    return out2d[:batch].reshape(batch, num_feats, dout)


def init_params(key,
                num_feats=NUM_REWARD_FEATS,
                name_embedding_size=NAME_EMBEDDING_SIZE,
                hidden_size=HIDDEN_SIZE,
                per_feat_output_size=PER_FEAT_OUTPUT_SIZE):
    """Deterministic init mimicking nn.Embedding (N(0,1)) and nn.Linear
    (U(-1/sqrt(in), 1/sqrt(in))); weights stored transposed (in, out)."""
    k_emb, k_w1, k_b1, k_w2, k_b2 = jax.random.split(key, 5)
    din = name_embedding_size + 1
    emb = jax.random.normal(k_emb, (num_feats, name_embedding_size), jnp.float32)
    b1_bound = 1.0 / jnp.sqrt(jnp.float32(din))
    w1_t = jax.random.uniform(k_w1, (num_feats, din, hidden_size),
                              jnp.float32, -b1_bound, b1_bound)
    b1 = jax.random.uniform(k_b1, (num_feats, hidden_size),
                            jnp.float32, -b1_bound, b1_bound)
    b2_bound = 1.0 / jnp.sqrt(jnp.float32(hidden_size))
    w2_t = jax.random.uniform(k_w2, (num_feats, hidden_size, per_feat_output_size),
                              jnp.float32, -b2_bound, b2_bound)
    b2 = jax.random.uniform(k_b2, (num_feats, per_feat_output_size),
                            jnp.float32, -b2_bound, b2_bound)
    return emb, w1_t, b1, w2_t, b2


if __name__ == "__main__":
    key = jax.random.PRNGKey(0)
    k_params, k_small, k_large = jax.random.split(key, 3)
    params = init_params(k_params)

    # 1) Small-shape check (forces the Pallas path so the kernel is exercised).
    rw_small = jax.random.normal(k_small, (2, NUM_REWARD_FEATS), jnp.float32)
    out_small = localized_reward_encoder_forward(rw_small, *params,
                                                 force_pallas=True)
    jax.block_until_ready(out_small)
    ref_small = _reference_forward(rw_small, *params)
    assert out_small.shape == (2, NUM_REWARD_FEATS, PER_FEAT_OUTPUT_SIZE), out_small.shape
    assert jnp.allclose(out_small, ref_small, atol=1e-4, rtol=1e-4), \
        float(jnp.max(jnp.abs(out_small - ref_small)))

    # 2) Multi-tile check (exercises the tiled, pipelined, parallel-grid path).
    rw_large = jax.random.normal(k_large, (2048, NUM_REWARD_FEATS), jnp.float32)
    out_large = localized_reward_encoder_forward(rw_large, *params)
    jax.block_until_ready(out_large)
    ref_large = _reference_forward(rw_large, *params)
    assert out_large.shape == (2048, NUM_REWARD_FEATS, PER_FEAT_OUTPUT_SIZE), out_large.shape
    assert jnp.allclose(out_large, ref_large, atol=1e-4, rtol=1e-4), \
        float(jnp.max(jnp.abs(out_large - ref_large)))

    print("KERNEL_OK")
</pallas_src>

<mosaic_0001>
module attributes {stable_mosaic.version = 11 : i64} {
  func.func @_encoder_kernel(%arg0: i32, %arg1: memref<8x8xf32, #tpu.memory_space<vmem>>, %arg2: memref<8x1x128xf32, #tpu.memory_space<vmem>>, %arg3: memref<8x1x128xf32, #tpu.memory_space<vmem>>, %arg4: memref<8x128x64xf32, #tpu.memory_space<vmem>>, %arg5: memref<8x1x64xf32, #tpu.memory_space<vmem>>, %arg6: memref<8x512xf32, #tpu.memory_space<vmem>>) attributes {dimension_semantics = [#tpu.dimension_semantics<parallel>], iteration_bounds = array<i64: 1>, scalar_prefetch = 0 : i64, scratch_operands = 0 : i64, tpu.core_type = #tpu.core_type<tc>, window_params = [{transform_indices = @transform_0, window_bounds = array<i64: 8, 8>}, {pipeline_mode = #tpu.pipeline_mode<synchronous>, transform_indices = @transform_1, window_bounds = array<i64: 8, 1, 128>}, {pipeline_mode = #tpu.pipeline_mode<synchronous>, transform_indices = @transform_2, window_bounds = array<i64: 8, 1, 128>}, {pipeline_mode = #tpu.pipeline_mode<synchronous>, transform_indices = @transform_3, window_bounds = array<i64: 8, 128, 64>}, {pipeline_mode = #tpu.pipeline_mode<synchronous>, transform_indices = @transform_4, window_bounds = array<i64: 8, 1, 64>}, {transform_indices = @transform_5, window_bounds = array<i64: 8, 512>}]} {
    %c0 = arith.constant 0 : index
    %c0_0 = arith.constant 0 : index
    %0 = vector.load %arg1[%c0, %c0_0] : memref<8x8xf32, #tpu.memory_space<vmem>>, vector<8x1xf32>
    %c0_1 = arith.constant 0 : index
    %c0_2 = arith.constant 0 : index
    %c0_3 = arith.constant 0 : index
    %1 = vector.load %arg3[%c0_1, %c0_2, %c0_3] : memref<8x1x128xf32, #tpu.memory_space<vmem>>, vector<1x1x128xf32>
    %2 = vector.shape_cast %1 : vector<1x1x128xf32> to vector<1x128xf32>
    %3 = vector.broadcast %0 : vector<8x1xf32> to vector<8x128xf32>
    %4 = vector.broadcast %2 : vector<1x128xf32> to vector<8x128xf32>
    %5 = arith.mulf %3, %4 : vector<8x128xf32>
    %c0_4 = arith.constant 0 : index
    %c0_5 = arith.constant 0 : index
    %c0_6 = arith.constant 0 : index
    %6 = vector.load %arg2[%c0_4, %c0_5, %c0_6] : memref<8x1x128xf32, #tpu.memory_space<vmem>>, vector<1x1x128xf32>
    %7 = vector.shape_cast %6 : vector<1x1x128xf32> to vector<1x128xf32>
    %8 = vector.broadcast %7 : vector<1x128xf32> to vector<8x128xf32>
    %9 = arith.addf %5, %8 : vector<8x128xf32>
    %cst = arith.constant 0.000000e+00 : f32
    %10 = vector.broadcast %cst : f32 to vector<8x128xf32>
    %11 = arith.maximumf %9, %10 : vector<8x128xf32>
    %c0_7 = arith.constant 0 : index
    %c0_8 = arith.constant 0 : index
    %c0_9 = arith.constant 0 : index
    %12 = vector.load %arg4[%c0_7, %c0_8, %c0_9] : memref<8x128x64xf32, #tpu.memory_space<vmem>>, vector<1x128x64xf32>
    %13 = vector.shape_cast %12 : vector<1x128x64xf32> to vector<128x64xf32>
    %cst_10 = arith.constant dense<0.000000e+00> : vector<8x64xf32>
    %14 = tpu.matmul %11, %13, %cst_10 {dimension_numbers = #tpu.dot_dimension_numbers<[1], [0], [0], [1], [0, 0, 1, 1], [], []>} : vector<8x128xf32>, vector<128x64xf32>, vector<8x64xf32> -> vector<8x64xf32>
    %c0_11 = arith.constant 0 : index
    %c0_12 = arith.constant 0 : index
    %c0_13 = arith.constant 0 : index
    %15 = vector.load %arg5[%c0_11, %c0_12, %c0_13] : memref<8x1x64xf32, #tpu.memory_space<vmem>>, vector<1x1x64xf32>
    %16 = vector.shape_cast %15 : vector<1x1x64xf32> to vector<1x64xf32>
    %17 = vector.broadcast %16 : vector<1x64xf32> to vector<8x64xf32>
    %18 = arith.addf %14, %17 : vector<8x64xf32>
    %c0_14 = arith.constant 0 : index
    %c1 = arith.constant 1 : index
    %19 = vector.load %arg1[%c0_14, %c1] : memref<8x8xf32, #tpu.memory_space<vmem>>, vector<8x1xf32>
    %c1_15 = arith.constant 1 : index
    %c0_16 = arith.constant 0 : index
    %c0_17 = arith.constant 0 : index
    %20 = vector.load %arg3[%c1_15, %c0_16, %c0_17] : memref<8x1x128xf32, #tpu.memory_space<vmem>>, vector<1x1x128xf32>
    %21 = vector.shape_cast %20 : vector<1x1x128xf32> to vector<1x128xf32>
    %22 = vector.broadcast %19 : vector<8x1xf32> to vector<8x128xf32>
    %23 = vector.broadcast %21 : vector<1x128xf32> to vector<8x128xf32>
    %24 = arith.mulf %22, %23 : vector<8x128xf32>
    %c1_18 = arith.constant 1 : index
    %c0_19 = arith.constant 0 : index
    %c0_20 = arith.constant 0 : index
    %25 = vector.load %arg2[%c1_18, %c0_19, %c0_20] : memref<8x1x128xf32, #tpu.memory_space<vmem>>, vector<1x1x128xf32>
    %26 = vector.shape_cast %25 : vector<1x1x128xf32> to vector<1x128xf32>
    %27 = vector.broadcast %26 : vector<1x128xf32> to vector<8x128xf32>
    %28 = arith.addf %24, %27 : vector<8x128xf32>
    %cst_21 = arith.constant 0.000000e+00 : f32
    %29 = vector.broadcast %cst_21 : f32 to vector<8x128xf32>
    %30 = arith.maximumf %28, %29 : vector<8x128xf32>
    %c1_22 = arith.constant 1 : index
    %c0_23 = arith.constant 0 : index
    %c0_24 = arith.constant 0 : index
    %31 = vector.load %arg4[%c1_22, %c0_23, %c0_24] : memref<8x128x64xf32, #tpu.memory_space<vmem>>, vector<1x128x64xf32>
    %32 = vector.shape_cast %31 : vector<1x128x64xf32> to vector<128x64xf32>
    %cst_25 = arith.constant dense<0.000000e+00> : vector<8x64xf32>
    %33 = tpu.matmul %30, %32, %cst_25 {dimension_numbers = #tpu.dot_dimension_numbers<[1], [0], [0], [1], [0, 0, 1, 1], [], []>} : vector<8x128xf32>, vector<128x64xf32>, vector<8x64xf32> -> vector<8x64xf32>
    %c1_26 = arith.constant 1 : index
    %c0_27 = arith.constant 0 : index
    %c0_28 = arith.constant 0 : index
    %34 = vector.load %arg5[%c1_26, %c0_27, %c0_28] : memref<8x1x64xf32, #tpu.memory_space<vmem>>, vector<1x1x64xf32>
    %35 = vector.shape_cast %34 : vector<1x1x64xf32> to vector<1x64xf32>
    %36 = vector.broadcast %35 : vector<1x64xf32> to vector<8x64xf32>
    %37 = arith.addf %33, %36 : vector<8x64xf32>
    %c0_29 = arith.constant 0 : index
    %c2 = arith.constant 2 : index
    %38 = vector.load %arg1[%c0_29, %c2] : memref<8x8xf32, #tpu.memory_space<vmem>>, vector<8x1xf32>
    %c2_30 = arith.constant 2 : index
    %c0_31 = arith.constant 0 : index
    %c0_32 = arith.constant 0 : index
    %39 = vector.load %arg3[%c2_30, %c0_31, %c0_32] : memref<8x1x128xf32, #tpu.memory_space<vmem>>, vector<1x1x128xf32>
    %40 = vector.shape_cast %39 : vector<1x1x128xf32> to vector<1x128xf32>
    %41 = vector.broadcast %38 : vector<8x1xf32> to vector<8x128xf32>
    %42 = vector.broadcast %40 : vector<1x128xf32> to vector<8x128xf32>
    %43 = arith.mulf %41, %42 : vector<8x128xf32>
    %c2_33 = arith.constant 2 : index
    %c0_34 = arith.constant 0 : index
    %c0_35 = arith.constant 0 : index
    %44 = vector.load %arg2[%c2_33, %c0_34, %c0_35] : memref<8x1x128xf32, #tpu.memory_space<vmem>>, vector<1x1x128xf32>
    %45 = vector.shape_cast %44 : vector<1x1x128xf32> to vector<1x128xf32>
    %46 = vector.broadcast %45 : vector<1x128xf32> to vector<8x128xf32>
    %47 = arith.addf %43, %46 : vector<8x128xf32>
    %cst_36 = arith.constant 0.000000e+00 : f32
    %48 = vector.broadcast %cst_36 : f32 to vector<8x128xf32>
    %49 = arith.maximumf %47, %48 : vector<8x128xf32>
    %c2_37 = arith.constant 2 : index
    %c0_38 = arith.constant 0 : index
    %c0_39 = arith.constant 0 : index
    %50 = vector.load %arg4[%c2_37, %c0_38, %c0_39] : memref<8x128x64xf32, #tpu.memory_space<vmem>>, vector<1x128x64xf32>
    %51 = vector.shape_cast %50 : vector<1x128x64xf32> to vector<128x64xf32>
    %cst_40 = arith.constant dense<0.000000e+00> : vector<8x64xf32>
    %52 = tpu.matmul %49, %51, %cst_40 {dimension_numbers = #tpu.dot_dimension_numbers<[1], [0], [0], [1], [0, 0, 1, 1], [], []>} : vector<8x128xf32>, vector<128x64xf32>, vector<8x64xf32> -> vector<8x64xf32>
    %c2_41 = arith.constant 2 : index
    %c0_42 = arith.constant 0 : index
    %c0_43 = arith.constant 0 : index
    %53 = vector.load %arg5[%c2_41, %c0_42, %c0_43] : memref<8x1x64xf32, #tpu.memory_space<vmem>>, vector<1x1x64xf32>
    %54 = vector.shape_cast %53 : vector<1x1x64xf32> to vector<1x64xf32>
    %55 = vector.broadcast %54 : vector<1x64xf32> to vector<8x64xf32>
    %56 = arith.addf %52, %55 : vector<8x64xf32>
    %c0_44 = arith.constant 0 : index
    %c3 = arith.constant 3 : index
    %57 = vector.load %arg1[%c0_44, %c3] : memref<8x8xf32, #tpu.memory_space<vmem>>, vector<8x1xf32>
    %c3_45 = arith.constant 3 : index
    %c0_46 = arith.constant 0 : index
    %c0_47 = arith.constant 0 : index
    %58 = vector.load %arg3[%c3_45, %c0_46, %c0_47] : memref<8x1x128xf32, #tpu.memory_space<vmem>>, vector<1x1x128xf32>
    %59 = vector.shape_cast %58 : vector<1x1x128xf32> to vector<1x128xf32>
    %60 = vector.broadcast %57 : vector<8x1xf32> to vector<8x128xf32>
    %61 = vector.broadcast %59 : vector<1x128xf32> to vector<8x128xf32>
    %62 = arith.mulf %60, %61 : vector<8x128xf32>
    %c3_48 = arith.constant 3 : index
    %c0_49 = arith.constant 0 : index
    %c0_50 = arith.constant 0 : index
    %63 = vector.load %arg2[%c3_48, %c0_49, %c0_50] : memref<8x1x128xf32, #tpu.memory_space<vmem>>, vector<1x1x128xf32>
    %64 = vector.shape_cast %63 : vector<1x1x128xf32> to vector<1x128xf32>
    %65 = vector.broadcast %64 : vector<1x128xf32> to vector<8x128xf32>
    %66 = arith.addf %62, %65 : vector<8x128xf32>
    %cst_51 = arith.constant 0.000000e+00 : f32
    %67 = vector.broadcast %cst_51 : f32 to vector<8x128xf32>
    %68 = arith.maximumf %66, %67 : vector<8x128xf32>
    %c3_52 = arith.constant 3 : index
    %c0_53 = arith.constant 0 : index
    %c0_54 = arith.constant 0 : index
    %69 = vector.load %arg4[%c3_52, %c0_53, %c0_54] : memref<8x128x64xf32, #tpu.memory_space<vmem>>, vector<1x128x64xf32>
    %70 = vector.shape_cast %69 : vector<1x128x64xf32> to vector<128x64xf32>
    %cst_55 = arith.constant dense<0.000000e+00> : vector<8x64xf32>
    %71 = tpu.matmul %68, %70, %cst_55 {dimension_numbers = #tpu.dot_dimension_numbers<[1], [0], [0], [1], [0, 0, 1, 1], [], []>} : vector<8x128xf32>, vector<128x64xf32>, vector<8x64xf32> -> vector<8x64xf32>
    %c3_56 = arith.constant 3 : index
    %c0_57 = arith.constant 0 : index
    %c0_58 = arith.constant 0 : index
    %72 = vector.load %arg5[%c3_56, %c0_57, %c0_58] : memref<8x1x64xf32, #tpu.memory_space<vmem>>, vector<1x1x64xf32>
    %73 = vector.shape_cast %72 : vector<1x1x64xf32> to vector<1x64xf32>
    %74 = vector.broadcast %73 : vector<1x64xf32> to vector<8x64xf32>
    %75 = arith.addf %71, %74 : vector<8x64xf32>
    %c0_59 = arith.constant 0 : index
    %c4 = arith.constant 4 : index
    %76 = vector.load %arg1[%c0_59, %c4] : memref<8x8xf32, #tpu.memory_space<vmem>>, vector<8x1xf32>
    %c4_60 = arith.constant 4 : index
    %c0_61 = arith.constant 0 : index
    %c0_62 = arith.constant 0 : index
    %77 = vector.load %arg3[%c4_60, %c0_61, %c0_62] : memref<8x1x128xf32, #tpu.memory_space<vmem>>, vector<1x1x128xf32>
    %78 = vector.shape_cast %77 : vector<1x1x128xf32> to vector<1x128xf32>
    %79 = vector.broadcast %76 : vector<8x1xf32> to vector<8x128xf32>
    %80 = vector.broadcast %78 : vector<1x128xf32> to vector<8x128xf32>
    %81 = arith.mulf %79, %80 : vector<8x128xf32>
    %c4_63 = arith.constant 4 : index
    %c0_64 = arith.constant 0 : index
    %c0_65 = arith.constant 0 : index
    %82 = vector.load %arg2[%c4_63, %c0_64, %c0_65] : memref<8x1x128xf32, #tpu.memory_space<vmem>>, vector<1x1x128xf32>
    %83 = vector.shape_cast %82 : vector<1x1x128xf32> to vector<1x128xf32>
    %84 = vector.broadcast %83 : vector<1x128xf32> to vector<8x128xf32>
    %85 = arith.addf %81, %84 : vector<8x128xf32>
    %cst_66 = arith.constant 0.000000e+00 : f32
    %86 = vector.broadcast %cst_66 : f32 to vector<8x128xf32>
    %87 = arith.maximumf %85, %86 : vector<8x128xf32>
    %c4_67 = arith.constant 4 : index
    %c0_68 = arith.constant 0 : index
    %c0_69 = arith.constant 0 : index
    %88 = vector.load %arg4[%c4_67, %c0_68, %c0_69] : memref<8x128x64xf32, #tpu.memory_space<vmem>>, vector<1x128x64xf32>
    %89 = vector.shape_cast %88 : vector<1x128x64xf32> to vector<128x64xf32>
    %cst_70 = arith.constant dense<0.000000e+00> : vector<8x64xf32>
    %90 = tpu.matmul %87, %89, %cst_70 {dimension_numbers = #tpu.dot_dimension_numbers<[1], [0], [0], [1], [0, 0, 1, 1], [], []>} : vector<8x128xf32>, vector<128x64xf32>, vector<8x64xf32> -> vector<8x64xf32>
    %c4_71 = arith.constant 4 : index
    %c0_72 = arith.constant 0 : index
    %c0_73 = arith.constant 0 : index
    %91 = vector.load %arg5[%c4_71, %c0_72, %c0_73] : memref<8x1x64xf32, #tpu.memory_space<vmem>>, vector<1x1x64xf32>
    %92 = vector.shape_cast %91 : vector<1x1x64xf32> to vector<1x64xf32>
    %93 = vector.broadcast %92 : vector<1x64xf32> to vector<8x64xf32>
    %94 = arith.addf %90, %93 : vector<8x64xf32>
    %c0_74 = arith.constant 0 : index
    %c5 = arith.constant 5 : index
    %95 = vector.load %arg1[%c0_74, %c5] : memref<8x8xf32, #tpu.memory_space<vmem>>, vector<8x1xf32>
    %c5_75 = arith.constant 5 : index
    %c0_76 = arith.constant 0 : index
    %c0_77 = arith.constant 0 : index
    %96 = vector.load %arg3[%c5_75, %c0_76, %c0_77] : memref<8x1x128xf32, #tpu.memory_space<vmem>>, vector<1x1x128xf32>
    %97 = vector.shape_cast %96 : vector<1x1x128xf32> to vector<1x128xf32>
    %98 = vector.broadcast %95 : vector<8x1xf32> to vector<8x128xf32>
    %99 = vector.broadcast %97 : vector<1x128xf32> to vector<8x128xf32>
    %100 = arith.mulf %98, %99 : vector<8x128xf32>
    %c5_78 = arith.constant 5 : index
    %c0_79 = arith.constant 0 : index
    %c0_80 = arith.constant 0 : index
    %101 = vector.load %arg2[%c5_78, %c0_79, %c0_80] : memref<8x1x128xf32, #tpu.memory_space<vmem>>, vector<1x1x128xf32>
    %102 = vector.shape_cast %101 : vector<1x1x128xf32> to vector<1x128xf32>
    %103 = vector.broadcast %102 : vector<1x128xf32> to vector<8x128xf32>
    %104 = arith.addf %100, %103 : vector<8x128xf32>
    %cst_81 = arith.constant 0.000000e+00 : f32
    %105 = vector.broadcast %cst_81 : f32 to vector<8x128xf32>
    %106 = arith.maximumf %104, %105 : vector<8x128xf32>
    %c5_82 = arith.constant 5 : index
    %c0_83 = arith.constant 0 : index
    %c0_84 = arith.constant 0 : index
    %107 = vector.load %arg4[%c5_82, %c0_83, %c0_84] : memref<8x128x64xf32, #tpu.memory_space<vmem>>, vector<1x128x64xf32>
    %108 = vector.shape_cast %107 : vector<1x128x64xf32> to vector<128x64xf32>
    %cst_85 = arith.constant dense<0.000000e+00> : vector<8x64xf32>
    %109 = tpu.matmul %106, %108, %cst_85 {dimension_numbers = #tpu.dot_dimension_numbers<[1], [0], [0], [1], [0, 0, 1, 1], [], []>} : vector<8x128xf32>, vector<128x64xf32>, vector<8x64xf32> -> vector<8x64xf32>
    %c5_86 = arith.constant 5 : index
    %c0_87 = arith.constant 0 : index
    %c0_88 = arith.constant 0 : index
    %110 = vector.load %arg5[%c5_86, %c0_87, %c0_88] : memref<8x1x64xf32, #tpu.memory_space<vmem>>, vector<1x1x64xf32>
    %111 = vector.shape_cast %110 : vector<1x1x64xf32> to vector<1x64xf32>
    %112 = vector.broadcast %111 : vector<1x64xf32> to vector<8x64xf32>
    %113 = arith.addf %109, %112 : vector<8x64xf32>
    %c0_89 = arith.constant 0 : index
    %c6 = arith.constant 6 : index
    %114 = vector.load %arg1[%c0_89, %c6] : memref<8x8xf32, #tpu.memory_space<vmem>>, vector<8x1xf32>
    %c6_90 = arith.constant 6 : index
    %c0_91 = arith.constant 0 : index
    %c0_92 = arith.constant 0 : index
    %115 = vector.load %arg3[%c6_90, %c0_91, %c0_92] : memref<8x1x128xf32, #tpu.memory_space<vmem>>, vector<1x1x128xf32>
    %116 = vector.shape_cast %115 : vector<1x1x128xf32> to vector<1x128xf32>
    %117 = vector.broadcast %114 : vector<8x1xf32> to vector<8x128xf32>
    %118 = vector.broadcast %116 : vector<1x128xf32> to vector<8x128xf32>
    %119 = arith.mulf %117, %118 : vector<8x128xf32>
    %c6_93 = arith.constant 6 : index
    %c0_94 = arith.constant 0 : index
    %c0_95 = arith.constant 0 : index
    %120 = vector.load %arg2[%c6_93, %c0_94, %c0_95] : memref<8x1x128xf32, #tpu.memory_space<vmem>>, vector<1x1x128xf32>
    %121 = vector.shape_cast %120 : vector<1x1x128xf32> to vector<1x128xf32>
    %122 = vector.broadcast %121 : vector<1x128xf32> to vector<8x128xf32>
    %123 = arith.addf %119, %122 : vector<8x128xf32>
    %cst_96 = arith.constant 0.000000e+00 : f32
    %124 = vector.broadcast %cst_96 : f32 to vector<8x128xf32>
    %125 = arith.maximumf %123, %124 : vector<8x128xf32>
    %c6_97 = arith.constant 6 : index
    %c0_98 = arith.constant 0 : index
    %c0_99 = arith.constant 0 : index
    %126 = vector.load %arg4[%c6_97, %c0_98, %c0_99] : memref<8x128x64xf32, #tpu.memory_space<vmem>>, vector<1x128x64xf32>
    %127 = vector.shape_cast %126 : vector<1x128x64xf32> to vector<128x64xf32>
    %cst_100 = arith.constant dense<0.000000e+00> : vector<8x64xf32>
    %128 = tpu.matmul %125, %127, %cst_100 {dimension_numbers = #tpu.dot_dimension_numbers<[1], [0], [0], [1], [0, 0, 1, 1], [], []>} : vector<8x128xf32>, vector<128x64xf32>, vector<8x64xf32> -> vector<8x64xf32>
    %c6_101 = arith.constant 6 : index
    %c0_102 = arith.constant 0 : index
    %c0_103 = arith.constant 0 : index
    %129 = vector.load %arg5[%c6_101, %c0_102, %c0_103] : memref<8x1x64xf32, #tpu.memory_space<vmem>>, vector<1x1x64xf32>
    %130 = vector.shape_cast %129 : vector<1x1x64xf32> to vector<1x64xf32>
    %131 = vector.broadcast %130 : vector<1x64xf32> to vector<8x64xf32>
    %132 = arith.addf %128, %131 : vector<8x64xf32>
    %c0_104 = arith.constant 0 : index
    %c7 = arith.constant 7 : index
    %133 = vector.load %arg1[%c0_104, %c7] : memref<8x8xf32, #tpu.memory_space<vmem>>, vector<8x1xf32>
    %c7_105 = arith.constant 7 : index
    %c0_106 = arith.constant 0 : index
    %c0_107 = arith.constant 0 : index
    %134 = vector.load %arg3[%c7_105, %c0_106, %c0_107] : memref<8x1x128xf32, #tpu.memory_space<vmem>>, vector<1x1x128xf32>
    %135 = vector.shape_cast %134 : vector<1x1x128xf32> to vector<1x128xf32>
    %136 = vector.broadcast %133 : vector<8x1xf32> to vector<8x128xf32>
    %137 = vector.broadcast %135 : vector<1x128xf32> to vector<8x128xf32>
    %138 = arith.mulf %136, %137 : vector<8x128xf32>
    %c7_108 = arith.constant 7 : index
    %c0_109 = arith.constant 0 : index
    %c0_110 = arith.constant 0 : index
    %139 = vector.load %arg2[%c7_108, %c0_109, %c0_110] : memref<8x1x128xf32, #tpu.memory_space<vmem>>, vector<1x1x128xf32>
    %140 = vector.shape_cast %139 : vector<1x1x128xf32> to vector<1x128xf32>
    %141 = vector.broadcast %140 : vector<1x128xf32> to vector<8x128xf32>
    %142 = arith.addf %138, %141 : vector<8x128xf32>
    %cst_111 = arith.constant 0.000000e+00 : f32
    %143 = vector.broadcast %cst_111 : f32 to vector<8x128xf32>
    %144 = arith.maximumf %142, %143 : vector<8x128xf32>
    %c7_112 = arith.constant 7 : index
    %c0_113 = arith.constant 0 : index
    %c0_114 = arith.constant 0 : index
    %145 = vector.load %arg4[%c7_112, %c0_113, %c0_114] : memref<8x128x64xf32, #tpu.memory_space<vmem>>, vector<1x128x64xf32>
    %146 = vector.shape_cast %145 : vector<1x128x64xf32> to vector<128x64xf32>
    %cst_115 = arith.constant dense<0.000000e+00> : vector<8x64xf32>
    %147 = tpu.matmul %144, %146, %cst_115 {dimension_numbers = #tpu.dot_dimension_numbers<[1], [0], [0], [1], [0, 0, 1, 1], [], []>} : vector<8x128xf32>, vector<128x64xf32>, vector<8x64xf32> -> vector<8x64xf32>
    %c7_116 = arith.constant 7 : index
    %c0_117 = arith.constant 0 : index
    %c0_118 = arith.constant 0 : index
    %148 = vector.load %arg5[%c7_116, %c0_117, %c0_118] : memref<8x1x64xf32, #tpu.memory_space<vmem>>, vector<1x1x64xf32>
    %149 = vector.shape_cast %148 : vector<1x1x64xf32> to vector<1x64xf32>
    %150 = vector.broadcast %149 : vector<1x64xf32> to vector<8x64xf32>
    %151 = arith.addf %147, %150 : vector<8x64xf32>
    %152 = tpu.concatenate %18, %37, %56, %75, %94, %113, %132, %151 in 1 : vector<8x64xf32>, vector<8x64xf32>, vector<8x64xf32>, vector<8x64xf32>, vector<8x64xf32>, vector<8x64xf32>, vector<8x64xf32>, vector<8x64xf32> -> vector<8x512xf32>
    %c0_119 = arith.constant 0 : index
    %c0_120 = arith.constant 0 : index
    %153 = vector.load %arg6[%c0_119, %c0_120] : memref<8x512xf32, #tpu.memory_space<vmem>>, vector<8x512xf32>
    tpu.vector_store %arg6[%c0_119, %c0_120], %152 {strides = array<i32>} : memref<8x512xf32, #tpu.memory_space<vmem>>, vector<8x512xf32>,
    return
  }
  func.func @transform_0(%arg0: i32) -> (i32, i32) {
    %c0_i32 = arith.constant 0 : i32
    %c0_i32_0 = arith.constant 0 : i32
    return %arg0, %c0_i32 : i32, i32
  }
  func.func @transform_1(%arg0: i32) -> (i32, i32, i32) {
    %c0_i32 = arith.constant 0 : i32
    %c0_i32_0 = arith.constant 0 : i32
    %c0_i32_1 = arith.constant 0 : i32
    %c0_i32_2 = arith.constant 0 : i32
    return %c0_i32, %c0_i32_0, %c0_i32_1 : i32, i32, i32
  }
  func.func @transform_2(%arg0: i32) -> (i32, i32, i32) {
    %c0_i32 = arith.constant 0 : i32
    %c0_i32_0 = arith.constant 0 : i32
    %c0_i32_1 = arith.constant 0 : i32
    %c0_i32_2 = arith.constant 0 : i32
    return %c0_i32, %c0_i32_0, %c0_i32_1 : i32, i32, i32
  }
  func.func @transform_3(%arg0: i32) -> (i32, i32, i32) {
    %c0_i32 = arith.constant 0 : i32
    %c0_i32_0 = arith.constant 0 : i32
    %c0_i32_1 = arith.constant 0 : i32
    %c0_i32_2 = arith.constant 0 : i32
    return %c0_i32, %c0_i32_0, %c0_i32_1 : i32, i32, i32
  }
  func.func @transform_4(%arg0: i32) -> (i32, i32, i32) {
    %c0_i32 = arith.constant 0 : i32
    %c0_i32_0 = arith.constant 0 : i32
    %c0_i32_1 = arith.constant 0 : i32
    %c0_i32_2 = arith.constant 0 : i32
    return %c0_i32, %c0_i32_0, %c0_i32_1 : i32, i32, i32
  }
  func.func @transform_5(%arg0: i32) -> (i32, i32) {
    %c0_i32 = arith.constant 0 : i32
    %c0_i32_0 = arith.constant 0 : i32
    return %arg0, %c0_i32 : i32, i32
  }
}

</mosaic_0001>

<llo_original>
// kernel: tpu_custom_call.1
$region0: #{tpu_custom_call.1}
  #allocation0 [shape = 'u32[]', space=smem, size = 0x4, offset = 0x4, fixed_abs, tag = 'smem constant byte address 0x4 - core index']
  #allocation1 [shape = 'u32[144,128]{1,0:T(1,128)}', space=vmem, size = 0x12000, scoped, tag = 'internal scratch']
  %s0 = inlined_call_operand.vmem [shape: f32[8,8], index: 0, kind: input, shape index: {}]
  %s1 = inlined_call_operand.vmem [shape: f32[8,1,128], index: 1, kind: input, shape index: {}]
  %s2 = inlined_call_operand.vmem [shape: f32[8,1,128], index: 2, kind: input, shape index: {}]
  %s3 = inlined_call_operand.vmem [shape: f32[8,128,64], index: 3, kind: input, shape index: {}]
  %s4 = inlined_call_operand.vmem [shape: f32[8,1,64], index: 4, kind: input, shape index: {}]
  %s5 = inlined_call_operand.hbm [shape: f32[8,512], index: 5, kind: output, shape index: {}]
  %s6 = sld [smem:[#allocation0]]
  $region30: #{tpu_custom_call.1} parent=0
    _
  %s8 = ssub.s32 1, %s6
  %s9 = scalar_select 0, %s8, %s6
  $region1: #{tpu_custom_call.1} parent=0
    #allocation2 [shape = 'u8[16384]{0}', space=vmem, size = 0x4000, scoped, tag = 'output window, operand 0, single buffered']
    #allocation3 [shape = 's32[1]{0}', space=sflag, size = 0x4, scoped, tag = 'scoped memory for tpu_custom_call.1']
    %10 = vsyncpa [#allocation3], 0
    // Predicated region
    $region2: #{tpu_custom_call.1} parent=1 // pred_check
      _
    $region3: #{tpu_custom_call.1} parent=1 // pred_check_branch
      %12 = sbr.rel (0) target = $region5
    $region4: #{tpu_custom_call.1} parent=1 // pred_region
      _
    $region5: #{tpu_custom_call.1} parent=1 // pred_fallthru
      _
    // Predicated region
    $region6: #{tpu_custom_call.1} parent=1 // pred_check
      _
    $region7: #{tpu_custom_call.1} parent=1 // pred_check_branch
      %14 = sbr.rel (0) target = $region9
    $region8: #{tpu_custom_call.1} parent=1 // pred_region
      _
    $region9: #{tpu_custom_call.1} parent=1 // pred_fallthru
      _
    // Predicated region
    $region10: #{tpu_custom_call.1} parent=1 // pred_check
      _
    $region11: #{tpu_custom_call.1} parent=1 // pred_check_branch
      %16 = sbr.rel (0) target = $region13
    $region12: #{tpu_custom_call.1} parent=1 // pred_region
      _
    $region13: #{tpu_custom_call.1} parent=1 // pred_fallthru
      _
    // Predicated region
    $region14: #{tpu_custom_call.1} parent=1 // pred_check
      _
    $region15: #{tpu_custom_call.1} parent=1 // pred_check_branch
      %18 = sbr.rel (0) target = $region17
    $region16: #{tpu_custom_call.1} parent=1 // pred_region
      _
    $region17: #{tpu_custom_call.1} parent=1 // pred_fallthru
      _
    // Predicated region
    $region18: #{tpu_custom_call.1} parent=1 // pred_check
      _
    $region19: #{tpu_custom_call.1} parent=1 // pred_check_branch
      %20 = sbr.rel (0) target = $region21
    $region20: #{tpu_custom_call.1} parent=1 // pred_region
      _
    $region21: #{tpu_custom_call.1} parent=1 // pred_fallthru
      _
    %v21 = vld [vmem:[%s0] sm:$0xff]
    %v22 = vld [vmem:[%s2] sm:$0x1]
    %24 = vset.pattern.permute.xlu0 0
    %25 = vperm.xlu0 %24, %v21
    %v26 = vpop.permute.xlu0 %25
    %v29 = vlaneseq
    %v30 = vshrl.u32 %v29, 7
    %v31 = vsub.s32 0, %v30
    %v32 = vrot.slane %v22, %v31
    %v34 = vmul.f32 %v26, %v32
    %v35 = vld [vmem:[%s1] sm:$0x1]
    %v37 = vlaneseq
    %v38 = vshrl.u32 %v37, 7
    %v39 = vsub.s32 0, %v38
    %v40 = vrot.slane %v35, %v39
    %v42 = vadd.f32 %v34, %v40
    %v43 = vmax.f32 %v42, 0.0
    %v44 = vld [vmem:[%s3] sm:$0xff]
    %v45 = vld [vmem:[%s3 + $0x8] sm:$0xff]
    %v46 = vld [vmem:[%s3 + $0x10] sm:$0xff]
    %v47 = vld [vmem:[%s3 + $0x18] sm:$0xff]
    %v48 = vld [vmem:[%s3 + $0x20] sm:$0xff]
    %v49 = vld [vmem:[%s3 + $0x28] sm:$0xff]
    %v50 = vld [vmem:[%s3 + $0x30] sm:$0xff]
    %v51 = vld [vmem:[%s3 + $0x38] sm:$0xff]
    %v52 = vld [vmem:[%s3 + $0x40] sm:$0xff]
    %v53 = vld [vmem:[%s3 + $0x48] sm:$0xff]
    %v54 = vld [vmem:[%s3 + $0x50] sm:$0xff]
    %v55 = vld [vmem:[%s3 + $0x58] sm:$0xff]
    %v56 = vld [vmem:[%s3 + $0x60] sm:$0xff]
    %v57 = vld [vmem:[%s3 + $0x68] sm:$0xff]
    %v58 = vld [vmem:[%s3 + $0x70] sm:$0xff]
    %v59 = vld [vmem:[%s3 + $0x78] sm:$0xff]
    %v60 = vld [vmem:[%s4] sm:$0x1]
    %v62 = vlaneseq
    %v63 = vshrl.u32 %v62, 7
    %v64 = vsub.s32 0, %v63
    %v65 = vrot.slane %v60, %v64
    %67 = vmatprep.subr.mxu0 0.0
    %68 = vmatpush1.msra.mxu0 %v59
    %69 = vmatprep.subr.mxu0 0.0
    %70 = vmatpush1.msra.mxu0 %v58
    %71 = vmatprep.subr.mxu0 0.0
    %72 = vmatpush1.msra.mxu0 %v57
    %73 = vmatprep.subr.mxu0 0.0
    %74 = vmatpush1.msra.mxu0 %v56
    %75 = vmatprep.subr.mxu0 0.0
    %76 = vmatpush1.msra.mxu0 %v55
    %77 = vmatprep.subr.mxu0 0.0
    %78 = vmatpush1.msra.mxu0 %v54
    %79 = vmatprep.subr.mxu0 0.0
    %80 = vmatpush1.msra.mxu0 %v53
    %81 = vmatprep.subr.mxu0 0.0
    %82 = vmatpush1.msra.mxu0 %v52
    %83 = vmatprep.subr.mxu0 0.0
    %84 = vmatpush1.msra.mxu0 %v51
    %85 = vmatprep.subr.mxu0 0.0
    %86 = vmatpush1.msra.mxu0 %v50
    %87 = vmatprep.subr.mxu0 0.0
    %88 = vmatpush1.msra.mxu0 %v49
    %89 = vmatprep.subr.mxu0 0.0
    %90 = vmatpush1.msra.mxu0 %v48
    %91 = vmatprep.subr.mxu0 0.0
    %92 = vmatpush1.msra.mxu0 %v47
    %93 = vmatprep.subr.mxu0 0.0
    %94 = vmatpush1.msra.mxu0 %v46
    %95 = vmatprep.subr.mxu0 0.0
    %96 = vmatpush1.msra.mxu0 %v45
    %97 = vmatprep.subr.mxu0 0.0
    %98 = vmatpush1.msra.mxu0 %v44
    %99 = vmatprep.subr.mxu0 0.0
    %100 = vmatpush2.msra.mxu0 0.0
    %101 = vmatprep.subr.mxu0 0.0
    %102 = vmatpush2.msra.mxu0 0.0
    %103 = vmatprep.subr.mxu0 0.0
    %104 = vmatpush2.msra.mxu0 0.0
    %105 = vmatprep.subr.mxu0 0.0
    %106 = vmatpush2.msra.mxu0 0.0
    %107 = vmatprep.subr.mxu0 0.0
    %108 = vmatpush2.msra.mxu0 0.0
    %109 = vmatprep.subr.mxu0 0.0
    %110 = vmatpush2.msra.mxu0 0.0
    %111 = vmatprep.subr.mxu0 0.0
    %112 = vmatpush2.msra.mxu0 0.0
    %113 = vmatprep.subr.mxu0 0.0
    %114 = vmatpush2.msra.mxu0 0.0
    %115 = vmatprep.subr.mxu0 0.0
    %116 = vmatpush2.msra.mxu0 0.0
    %117 = vmatprep.subr.mxu0 0.0
    %118 = vmatpush2.msra.mxu0 0.0
    %119 = vmatprep.subr.mxu0 0.0
    %120 = vmatpush2.msra.mxu0 0.0
    %121 = vmatprep.subr.mxu0 0.0
    %122 = vmatpush2.msra.mxu0 0.0
    %123 = vmatprep.subr.mxu0 0.0
    %124 = vmatpush2.msra.mxu0 0.0
    %125 = vmatprep.subr.mxu0 0.0
    %126 = vmatpush2.msra.mxu0 0.0
    %127 = vmatprep.subr.mxu0 0.0
    %128 = vmatpush2.msra.mxu0 0.0
    %129 = vmatprep.subr.mxu0 0.0
    %130 = vmatpush2.msra.mxu0 0.0
    %131 = vmatprep.mubr.f32.mxu0 0.0
    %132 = vmatmul.mubr.f32.gmra.mxu0 %v43
    %v133 = vpop.f32.mrf.mxu0
    %v134 = vadd.f32 %v65, %v133
    %v135 = vpop.f32.mrf.mxu0
    %136 = vdwg.mxu0
    %s137 = scalar_lea.vmem %s2, 1
    %v138 = vld [vmem:[%s137] sm:$0x1]
    %139 = vset.pattern.permute.xlu0 1
    %140 = vperm.xlu0 %139, %v21
    %v141 = vpop.permute.xlu0 %140
    %v144 = vlaneseq
    %v145 = vshrl.u32 %v144, 7
    %v146 = vsub.s32 0, %v145
    %v147 = vrot.slane %v138, %v146
    %v149 = vmul.f32 %v141, %v147
    %s150 = scalar_lea.vmem %s1, 1
    %v151 = vld [vmem:[%s150] sm:$0x1]
    %v153 = vlaneseq
    %v154 = vshrl.u32 %v153, 7
    %v155 = vsub.s32 0, %v154
    %v156 = vrot.slane %v151, %v155
    %v158 = vadd.f32 %v149, %v156
    %v159 = vmax.f32 %v158, 0.0
    %s160 = scalar_lea.vmem %s3, 128
    %v161 = vld [vmem:[%s160] sm:$0xff]
    %v162 = vld [vmem:[%s160 + $0x8] sm:$0xff]
    %v163 = vld [vmem:[%s160 + $0x10] sm:$0xff]
    %v164 = vld [vmem:[%s160 + $0x18] sm:$0xff]
    %v165 = vld [vmem:[%s160 + $0x20] sm:$0xff]
    %v166 = vld [vmem:[%s160 + $0x28] sm:$0xff]
    %v167 = vld [vmem:[%s160 + $0x30] sm:$0xff]
    %v168 = vld [vmem:[%s160 + $0x38] sm:$0xff]
    %v169 = vld [vmem:[%s160 + $0x40] sm:$0xff]
    %v170 = vld [vmem:[%s160 + $0x48] sm:$0xff]
    %v171 = vld [vmem:[%s160 + $0x50] sm:$0xff]
    %v172 = vld [vmem:[%s160 + $0x58] sm:$0xff]
    %v173 = vld [vmem:[%s160 + $0x60] sm:$0xff]
    %v174 = vld [vmem:[%s160 + $0x68] sm:$0xff]
    %v175 = vld [vmem:[%s160 + $0x70] sm:$0xff]
    %v176 = vld [vmem:[%s160 + $0x78] sm:$0xff]
    %s177 = scalar_lea.vmem %s4, 1
    %v178 = vld [vmem:[%s177] sm:$0x1]
    %v180 = vlaneseq
    %v181 = vshrl.u32 %v180, 7
    %v182 = vsub.s32 0, %v181
    %v183 = vrot.slane %v178, %v182
    %185 = vmatprep.subr.mxu0 0.0
    %186 = vmatpush1.msra.mxu0 %v176
    %187 = vmatprep.subr.mxu0 0.0
    %188 = vmatpush1.msra.mxu0 %v175
    %189 = vmatprep.subr.mxu0 0.0
    %190 = vmatpush1.msra.mxu0 %v174
    %191 = vmatprep.subr.mxu0 0.0
    %192 = vmatpush1.msra.mxu0 %v173
    %193 = vmatprep.subr.mxu0 0.0
    %194 = vmatpush1.msra.mxu0 %v172
    %195 = vmatprep.subr.mxu0 0.0
    %196 = vmatpush1.msra.mxu0 %v171
    %197 = vmatprep.subr.mxu0 0.0
    %198 = vmatpush1.msra.mxu0 %v170
    %199 = vmatprep.subr.mxu0 0.0
    %200 = vmatpush1.msra.mxu0 %v169
    %201 = vmatprep.subr.mxu0 0.0
    %202 = vmatpush1.msra.mxu0 %v168
    %203 = vmatprep.subr.mxu0 0.0
    %204 = vmatpush1.msra.mxu0 %v167
    %205 = vmatprep.subr.mxu0 0.0
    %206 = vmatpush1.msra.mxu0 %v166
    %207 = vmatprep.subr.mxu0 0.0
    %208 = vmatpush1.msra.mxu0 %v165
    %209 = vmatprep.subr.mxu0 0.0
    %210 = vmatpush1.msra.mxu0 %v164
    %211 = vmatprep.subr.mxu0 0.0
    %212 = vmatpush1.msra.mxu0 %v163
    %213 = vmatprep.subr.mxu0 0.0
    %214 = vmatpush1.msra.mxu0 %v162
    %215 = vmatprep.subr.mxu0 0.0
    %216 = vmatpush1.msra.mxu0 %v161
    %217 = vmatprep.subr.mxu0 0.0
    %218 = vmatpush2.msra.mxu0 0.0
    %219 = vmatprep.subr.mxu0 0.0
    %220 = vmatpush2.msra.mxu0 0.0
    %221 = vmatprep.subr.mxu0 0.0
    %222 = vmatpush2.msra.mxu0 0.0
    %223 = vmatprep.subr.mxu0 0.0
    %224 = vmatpush2.msra.mxu0 0.0
    %225 = vmatprep.subr.mxu0 0.0
    %226 = vmatpush2.msra.mxu0 0.0
    %227 = vmatprep.subr.mxu0 0.0
    %228 = vmatpush2.msra.mxu0 0.0
    %229 = vmatprep.subr.mxu0 0.0
    %230 = vmatpush2.msra.mxu0 0.0
    %231 = vmatprep.subr.mxu0 0.0
    %232 = vmatpush2.msra.mxu0 0.0
    %233 = vmatprep.subr.mxu0 0.0
    %234 = vmatpush2.msra.mxu0 0.0
    %235 = vmatprep.subr.mxu0 0.0
    %236 = vmatpush2.msra.mxu0 0.0
    %237 = vmatprep.subr.mxu0 0.0
    %238 = vmatpush2.msra.mxu0 0.0
    %239 = vmatprep.subr.mxu0 0.0
    %240 = vmatpush2.msra.mxu0 0.0
    %241 = vmatprep.subr.mxu0 0.0
    %242 = vmatpush2.msra.mxu0 0.0
    %243 = vmatprep.subr.mxu0 0.0
    %244 = vmatpush2.msra.mxu0 0.0
    %245 = vmatprep.subr.mxu0 0.0
    %246 = vmatpush2.msra.mxu0 0.0
    %247 = vmatprep.subr.mxu0 0.0
    %248 = vmatpush2.msra.mxu0 0.0
    %249 = vmatprep.mubr.f32.mxu0 0.0
    %250 = vmatmul.mubr.f32.gmra.mxu0 %v159
    %v251 = vpop.f32.mrf.mxu0
    %v252 = vadd.f32 %v183, %v251
    %v253 = vpop.f32.mrf.mxu0
    %254 = vdwg.mxu0
    %s255 = scalar_lea.vmem %s2, 2
    %v256 = vld [vmem:[%s255] sm:$0x1]
    %257 = vset.pattern.permute.xlu0 2
    %258 = vperm.xlu0 %257, %v21
    %v259 = vpop.permute.xlu0 %258
    %v262 = vlaneseq
    %v263 = vshrl.u32 %v262, 7
    %v264 = vsub.s32 0, %v263
    %v265 = vrot.slane %v256, %v264
    %v267 = vmul.f32 %v259, %v265
    %s268 = scalar_lea.vmem %s1, 2
    %v269 = vld [vmem:[%s268] sm:$0x1]
    %v271 = vlaneseq
    %v272 = vshrl.u32 %v271, 7
    %v273 = vsub.s32 0, %v272
    %v274 = vrot.slane %v269, %v273
    %v276 = vadd.f32 %v267, %v274
    %v277 = vmax.f32 %v276, 0.0
    %s278 = scalar_lea.vmem %s3, 256
    %v279 = vld [vmem:[%s278] sm:$0xff]
    %v280 = vld [vmem:[%s278 + $0x8] sm:$0xff]
    %v281 = vld [vmem:[%s278 + $0x10] sm:$0xff]
    %v282 = vld [vmem:[%s278 + $0x18] sm:$0xff]
    %v283 = vld [vmem:[%s278 + $0x20] sm:$0xff]
    %v284 = vld [vmem:[%s278 + $0x28] sm:$0xff]
    %v285 = vld [vmem:[%s278 + $0x30] sm:$0xff]
    %v286 = vld [vmem:[%s278 + $0x38] sm:$0xff]
    %v287 = vld [vmem:[%s278 + $0x40] sm:$0xff]
    %v288 = vld [vmem:[%s278 + $0x48] sm:$0xff]
    %v289 = vld [vmem:[%s278 + $0x50] sm:$0xff]
    %v290 = vld [vmem:[%s278 + $0x58] sm:$0xff]
    %v291 = vld [vmem:[%s278 + $0x60] sm:$0xff]
    %v292 = vld [vmem:[%s278 + $0x68] sm:$0xff]
    %v293 = vld [vmem:[%s278 + $0x70] sm:$0xff]
    %v294 = vld [vmem:[%s278 + $0x78] sm:$0xff]
    %s295 = scalar_lea.vmem %s4, 2
    %v296 = vld [vmem:[%s295] sm:$0x1]
    %v298 = vlaneseq
    %v299 = vshrl.u32 %v298, 7
    %v300 = vsub.s32 0, %v299
    %v301 = vrot.slane %v296, %v300
    %303 = vmatprep.subr.mxu0 0.0
    %304 = vmatpush1.msra.mxu0 %v294
    %305 = vmatprep.subr.mxu0 0.0
    %306 = vmatpush1.msra.mxu0 %v293
    %307 = vmatprep.subr.mxu0 0.0
    %308 = vmatpush1.msra.mxu0 %v292
    %309 = vmatprep.subr.mxu0 0.0
    %310 = vmatpush1.msra.mxu0 %v291
    %311 = vmatprep.subr.mxu0 0.0
    %312 = vmatpush1.msra.mxu0 %v290
    %313 = vmatprep.subr.mxu0 0.0
    %314 = vmatpush1.msra.mxu0 %v289
    %315 = vmatprep.subr.mxu0 0.0
    %316 = vmatpush1.msra.mxu0 %v288
    %317 = vmatprep.subr.mxu0 0.0
    %318 = vmatpush1.msra.mxu0 %v287
    %319 = vmatprep.subr.mxu0 0.0
    %320 = vmatpush1.msra.mxu0 %v286
    %321 = vmatprep.subr.mxu0 0.0
    %322 = vmatpush1.msra.mxu0 %v285
    %323 = vmatprep.subr.mxu0 0.0
    %324 = vmatpush1.msra.mxu0 %v284
    %325 = vmatprep.subr.mxu0 0.0
    %326 = vmatpush1.msra.mxu0 %v283
    %327 = vmatprep.subr.mxu0 0.0
    %328 = vmatpush1.msra.mxu0 %v282
    %329 = vmatprep.subr.mxu0 0.0
    %330 = vmatpush1.msra.mxu0 %v281
    %331 = vmatprep.subr.mxu0 0.0
    %332 = vmatpush1.msra.mxu0 %v280
    %333 = vmatprep.subr.mxu0 0.0
    %334 = vmatpush1.msra.mxu0 %v279
    %335 = vmatprep.subr.mxu0 0.0
    %336 = vmatpush2.msra.mxu0 0.0
    %337 = vmatprep.subr.mxu0 0.0
    %338 = vmatpush2.msra.mxu0 0.0
    %339 = vmatprep.subr.mxu0 0.0
    %340 = vmatpush2.msra.mxu0 0.0
    %341 = vmatprep.subr.mxu0 0.0
    %342 = vmatpush2.msra.mxu0 0.0
    %343 = vmatprep.subr.mxu0 0.0
    %344 = vmatpush2.msra.mxu0 0.0
    %345 = vmatprep.subr.mxu0 0.0
    %346 = vmatpush2.msra.mxu0 0.0
    %347 = vmatprep.subr.mxu0 0.0
    %348 = vmatpush2.msra.mxu0 0.0
    %349 = vmatprep.subr.mxu0 0.0
    %350 = vmatpush2.msra.mxu0 0.0
    %351 = vmatprep.subr.mxu0 0.0
    %352 = vmatpush2.msra.mxu0 0.0
    %353 = vmatprep.subr.mxu0 0.0
    %354 = vmatpush2.msra.mxu0 0.0
    %355 = vmatprep.subr.mxu0 0.0
    %356 = vmatpush2.msra.mxu0 0.0
    %357 = vmatprep.subr.mxu0 0.0
    %358 = vmatpush2.msra.mxu0 0.0
    %359 = vmatprep.subr.mxu0 0.0
    %360 = vmatpush2.msra.mxu0 0.0
    %361 = vmatprep.subr.mxu0 0.0
    %362 = vmatpush2.msra.mxu0 0.0
    %363 = vmatprep.subr.mxu0 0.0
    %364 = vmatpush2.msra.mxu0 0.0
    %365 = vmatprep.subr.mxu0 0.0
    %366 = vmatpush2.msra.mxu0 0.0
    %367 = vmatprep.mubr.f32.mxu0 0.0
    %368 = vmatmul.mubr.f32.gmra.mxu0 %v277
    %v369 = vpop.f32.mrf.mxu0
    %v370 = vadd.f32 %v301, %v369
    %v371 = vpop.f32.mrf.mxu0
    %372 = vdwg.mxu0
    %s373 = scalar_lea.vmem %s2, 3
    %v374 = vld [vmem:[%s373] sm:$0x1]
    %375 = vset.pattern.permute.xlu0 3
    %376 = vperm.xlu0 %375, %v21
    %v377 = vpop.permute.xlu0 %376
    %v380 = vlaneseq
    %v381 = vshrl.u32 %v380, 7
    %v382 = vsub.s32 0, %v381
    %v383 = vrot.slane %v374, %v382
    %v385 = vmul.f32 %v377, %v383
    %s386 = scalar_lea.vmem %s1, 3
    %v387 = vld [vmem:[%s386] sm:$0x1]
    %v389 = vlaneseq
    %v390 = vshrl.u32 %v389, 7
    %v391 = vsub.s32 0, %v390
    %v392 = vrot.slane %v387, %v391
    %v394 = vadd.f32 %v385, %v392
    %v395 = vmax.f32 %v394, 0.0
    %s396 = scalar_lea.vmem %s3, 384
    %v397 = vld [vmem:[%s396] sm:$0xff]
    %v398 = vld [vmem:[%s396 + $0x8] sm:$0xff]
    %v399 = vld [vmem:[%s396 + $0x10] sm:$0xff]
    %v400 = vld [vmem:[%s396 + $0x18] sm:$0xff]
    %v401 = vld [vmem:[%s396 + $0x20] sm:$0xff]
    %v402 = vld [vmem:[%s396 + $0x28] sm:$0xff]
    %v403 = vld [vmem:[%s396 + $0x30] sm:$0xff]
    %v404 = vld [vmem:[%s396 + $0x38] sm:$0xff]
    %v405 = vld [vmem:[%s396 + $0x40] sm:$0xff]
    %v406 = vld [vmem:[%s396 + $0x48] sm:$0xff]
    %v407 = vld [vmem:[%s396 + $0x50] sm:$0xff]
    %v408 = vld [vmem:[%s396 + $0x58] sm:$0xff]
    %v409 = vld [vmem:[%s396 + $0x60] sm:$0xff]
    %v410 = vld [vmem:[%s396 + $0x68] sm:$0xff]
    %v411 = vld [vmem:[%s396 + $0x70] sm:$0xff]
    %v412 = vld [vmem:[%s396 + $0x78] sm:$0xff]
    %s413 = scalar_lea.vmem %s4, 3
    %v414 = vld [vmem:[%s413] sm:$0x1]
    %v416 = vlaneseq
    %v417 = vshrl.u32 %v416, 7
    %v418 = vsub.s32 0, %v417
    %v419 = vrot.slane %v414, %v418
    %421 = vmatprep.subr.mxu0 0.0
    %422 = vmatpush1.msra.mxu0 %v412
    %423 = vmatprep.subr.mxu0 0.0
    %424 = vmatpush1.msra.mxu0 %v411
    %425 = vmatprep.subr.mxu0 0.0
    %426 = vmatpush1.msra.mxu0 %v410
    %427 = vmatprep.subr.mxu0 0.0
    %428 = vmatpush1.msra.mxu0 %v409
    %429 = vmatprep.subr.mxu0 0.0
    %430 = vmatpush1.msra.mxu0 %v408
    %431 = vmatprep.subr.mxu0 0.0
    %432 = vmatpush1.msra.mxu0 %v407
    %433 = vmatprep.subr.mxu0 0.0
    %434 = vmatpush1.msra.mxu0 %v406
    %435 = vmatprep.subr.mxu0 0.0
    %436 = vmatpush1.msra.mxu0 %v405
    %437 = vmatprep.subr.mxu0 0.0
    %438 = vmatpush1.msra.mxu0 %v404
    %439 = vmatprep.subr.mxu0 0.0
    %440 = vmatpush1.msra.mxu0 %v403
    %441 = vmatprep.subr.mxu0 0.0
    %442 = vmatpush1.msra.mxu0 %v402
    %443 = vmatprep.subr.mxu0 0.0
    %444 = vmatpush1.msra.mxu0 %v401
    %445 = vmatprep.subr.mxu0 0.0
    %446 = vmatpush1.msra.mxu0 %v400
    %447 = vmatprep.subr.mxu0 0.0
    %448 = vmatpush1.msra.mxu0 %v399
    %449 = vmatprep.subr.mxu0 0.0
    %450 = vmatpush1.msra.mxu0 %v398
    %451 = vmatprep.subr.mxu0 0.0
    %452 = vmatpush1.msra.mxu0 %v397
    %453 = vmatprep.subr.mxu0 0.0
    %454 = vmatpush2.msra.mxu0 0.0
    %455 = vmatprep.subr.mxu0 0.0
    %456 = vmatpush2.msra.mxu0 0.0
    %457 = vmatprep.subr.mxu0 0.0
    %458 = vmatpush2.msra.mxu0 0.0
    %459 = vmatprep.subr.mxu0 0.0
    %460 = vmatpush2.msra.mxu0 0.0
    %461 = vmatprep.subr.mxu0 0.0
    %462 = vmatpush2.msra.mxu0 0.0
    %463 = vmatprep.subr.mxu0 0.0
    %464 = vmatpush2.msra.mxu0 0.0
    %465 = vmatprep.subr.mxu0 0.0
    %466 = vmatpush2.msra.mxu0 0.0
    %467 = vmatprep.subr.mxu0 0.0
    %468 = vmatpush2.msra.mxu0 0.0
    %469 = vmatprep.subr.mxu0 0.0
    %470 = vmatpush2.msra.mxu0 0.0
    %471 = vmatprep.subr.mxu0 0.0
    %472 = vmatpush2.msra.mxu0 0.0
    %473 = vmatprep.subr.mxu0 0.0
    %474 = vmatpush2.msra.mxu0 0.0
    %475 = vmatprep.subr.mxu0 0.0
    %476 = vmatpush2.msra.mxu0 0.0
    %477 = vmatprep.subr.mxu0 0.0
    %478 = vmatpush2.msra.mxu0 0.0
    %479 = vmatprep.subr.mxu0 0.0
    %480 = vmatpush2.msra.mxu0 0.0
    %481 = vmatprep.subr.mxu0 0.0
    %482 = vmatpush2.msra.mxu0 0.0
    %483 = vmatprep.subr.mxu0 0.0
    %484 = vmatpush2.msra.mxu0 0.0
    %485 = vmatprep.mubr.f32.mxu0 0.0
    %486 = vmatmul.mubr.f32.gmra.mxu0 %v395
    %v487 = vpop.f32.mrf.mxu0
    %v488 = vadd.f32 %v419, %v487
    %v489 = vpop.f32.mrf.mxu0
    %490 = vdwg.mxu0
    %s491 = scalar_lea.vmem %s2, 4
    %v492 = vld [vmem:[%s491] sm:$0x1]
    %493 = vset.pattern.permute.xlu0 4
    %494 = vperm.xlu0 %493, %v21
    %v495 = vpop.permute.xlu0 %494
    %v498 = vlaneseq
    %v499 = vshrl.u32 %v498, 7
    %v500 = vsub.s32 0, %v499
    %v501 = vrot.slane %v492, %v500
    %v503 = vmul.f32 %v495, %v501
    %s504 = scalar_lea.vmem %s1, 4
    %v505 = vld [vmem:[%s504] sm:$0x1]
    %v507 = vlaneseq
    %v508 = vshrl.u32 %v507, 7
    %v509 = vsub.s32 0, %v508
    %v510 = vrot.slane %v505, %v509
    %v512 = vadd.f32 %v503, %v510
    %v513 = vmax.f32 %v512, 0.0
    %s514 = scalar_lea.vmem %s3, 512
    %v515 = vld [vmem:[%s514] sm:$0xff]
    %v516 = vld [vmem:[%s514 + $0x8] sm:$0xff]
    %v517 = vld [vmem:[%s514 + $0x10] sm:$0xff]
    %v518 = vld [vmem:[%s514 + $0x18] sm:$0xff]
    %v519 = vld [vmem:[%s514 + $0x20] sm:$0xff]
    %v520 = vld [vmem:[%s514 + $0x28] sm:$0xff]
    %v521 = vld [vmem:[%s514 + $0x30] sm:$0xff]
    %v522 = vld [vmem:[%s514 + $0x38] sm:$0xff]
    %v523 = vld [vmem:[%s514 + $0x40] sm:$0xff]
    %v524 = vld [vmem:[%s514 + $0x48] sm:$0xff]
    %v525 = vld [vmem:[%s514 + $0x50] sm:$0xff]
    %v526 = vld [vmem:[%s514 + $0x58] sm:$0xff]
    %v527 = vld [vmem:[%s514 + $0x60] sm:$0xff]
    %v528 = vld [vmem:[%s514 + $0x68] sm:$0xff]
    %v529 = vld [vmem:[%s514 + $0x70] sm:$0xff]
    %v530 = vld [vmem:[%s514 + $0x78] sm:$0xff]
    %s531 = scalar_lea.vmem %s4, 4
    %v532 = vld [vmem:[%s531] sm:$0x1]
    %v534 = vlaneseq
    %v535 = vshrl.u32 %v534, 7
    %v536 = vsub.s32 0, %v535
    %v537 = vrot.slane %v532, %v536
    %539 = vmatprep.subr.mxu0 0.0
    %540 = vmatpush1.msra.mxu0 %v530
    %541 = vmatprep.subr.mxu0 0.0
    %542 = vmatpush1.msra.mxu0 %v529
    %543 = vmatprep.subr.mxu0 0.0
    %544 = vmatpush1.msra.mxu0 %v528
    %545 = vmatprep.subr.mxu0 0.0
    %546 = vmatpush1.msra.mxu0 %v527
    %547 = vmatprep.subr.mxu0 0.0
    %548 = vmatpush1.msra.mxu0 %v526
    %549 = vmatprep.subr.mxu0 0.0
    %550 = vmatpush1.msra.mxu0 %v525
    %551 = vmatprep.subr.mxu0 0.0
    %552 = vmatpush1.msra.mxu0 %v524
    %553 = vmatprep.subr.mxu0 0.0
    %554 = vmatpush1.msra.mxu0 %v523
    %555 = vmatprep.subr.mxu0 0.0
    %556 = vmatpush1.msra.mxu0 %v522
    %557 = vmatprep.subr.mxu0 0.0
    %558 = vmatpush1.msra.mxu0 %v521
    %559 = vmatprep.subr.mxu0 0.0
    %560 = vmatpush1.msra.mxu0 %v520
    %561 = vmatprep.subr.mxu0 0.0
    %562 = vmatpush1.msra.mxu0 %v519
    %563 = vmatprep.subr.mxu0 0.0
    %564 = vmatpush1.msra.mxu0 %v518
    %565 = vmatprep.subr.mxu0 0.0
    %566 = vmatpush1.msra.mxu0 %v517
    %567 = vmatprep.subr.mxu0 0.0
    %568 = vmatpush1.msra.mxu0 %v516
    %569 = vmatprep.subr.mxu0 0.0
    %570 = vmatpush1.msra.mxu0 %v515
    %571 = vmatprep.subr.mxu0 0.0
    %572 = vmatpush2.msra.mxu0 0.0
    %573 = vmatprep.subr.mxu0 0.0
    %574 = vmatpush2.msra.mxu0 0.0
    %575 = vmatprep.subr.mxu0 0.0
    %576 = vmatpush2.msra.mxu0 0.0
    %577 = vmatprep.subr.mxu0 0.0
    %578 = vmatpush2.msra.mxu0 0.0
    %579 = vmatprep.subr.mxu0 0.0
    %580 = vmatpush2.msra.mxu0 0.0
    %581 = vmatprep.subr.mxu0 0.0
    %582 = vmatpush2.msra.mxu0 0.0
    %583 = vmatprep.subr.mxu0 0.0
    %584 = vmatpush2.msra.mxu0 0.0
    %585 = vmatprep.subr.mxu0 0.0
    %586 = vmatpush2.msra.mxu0 0.0
    %587 = vmatprep.subr.mxu0 0.0
    %588 = vmatpush2.msra.mxu0 0.0
    %589 = vmatprep.subr.mxu0 0.0
    %590 = vmatpush2.msra.mxu0 0.0
    %591 = vmatprep.subr.mxu0 0.0
    %592 = vmatpush2.msra.mxu0 0.0
    %593 = vmatprep.subr.mxu0 0.0
    %594 = vmatpush2.msra.mxu0 0.0
    %595 = vmatprep.subr.mxu0 0.0
    %596 = vmatpush2.msra.mxu0 0.0
    %597 = vmatprep.subr.mxu0 0.0
    %598 = vmatpush2.msra.mxu0 0.0
    %599 = vmatprep.subr.mxu0 0.0
    %600 = vmatpush2.msra.mxu0 0.0
    %601 = vmatprep.subr.mxu0 0.0
    %602 = vmatpush2.msra.mxu0 0.0
    %603 = vmatprep.mubr.f32.mxu0 0.0
    %604 = vmatmul.mubr.f32.gmra.mxu0 %v513
    %v605 = vpop.f32.mrf.mxu0
    %v606 = vadd.f32 %v537, %v605
    %v607 = vpop.f32.mrf.mxu0
    %608 = vdwg.mxu0
    %s609 = scalar_lea.vmem %s2, 5
    %v610 = vld [vmem:[%s609] sm:$0x1]
    %611 = vset.pattern.permute.xlu0 5
    %612 = vperm.xlu0 %611, %v21
    %v613 = vpop.permute.xlu0 %612
    %v616 = vlaneseq
    %v617 = vshrl.u32 %v616, 7
    %v618 = vsub.s32 0, %v617
    %v619 = vrot.slane %v610, %v618
    %v621 = vmul.f32 %v613, %v619
    %s622 = scalar_lea.vmem %s1, 5
    %v623 = vld [vmem:[%s622] sm:$0x1]
    %v625 = vlaneseq
    %v626 = vshrl.u32 %v625, 7
    %v627 = vsub.s32 0, %v626
    %v628 = vrot.slane %v623, %v627
    %v630 = vadd.f32 %v621, %v628
    %v631 = vmax.f32 %v630, 0.0
    %s632 = scalar_lea.vmem %s3, 640
    %v633 = vld [vmem:[%s632] sm:$0xff]
    %v634 = vld [vmem:[%s632 + $0x8] sm:$0xff]
    %v635 = vld [vmem:[%s632 + $0x10] sm:$0xff]
    %v636 = vld [vmem:[%s632 + $0x18] sm:$0xff]
    %v637 = vld [vmem:[%s632 + $0x20] sm:$0xff]
    %v638 = vld [vmem:[%s632 + $0x28] sm:$0xff]
    %v639 = vld [vmem:[%s632 + $0x30] sm:$0xff]
    %v640 = vld [vmem:[%s632 + $0x38] sm:$0xff]
    %v641 = vld [vmem:[%s632 + $0x40] sm:$0xff]
    %v642 = vld [vmem:[%s632 + $0x48] sm:$0xff]
    %v643 = vld [vmem:[%s632 + $0x50] sm:$0xff]
    %v644 = vld [vmem:[%s632 + $0x58] sm:$0xff]
    %v645 = vld [vmem:[%s632 + $0x60] sm:$0xff]
    %v646 = vld [vmem:[%s632 + $0x68] sm:$0xff]
    %v647 = vld [vmem:[%s632 + $0x70] sm:$0xff]
    %v648 = vld [vmem:[%s632 + $0x78] sm:$0xff]
    %s649 = scalar_lea.vmem %s4, 5
    %v650 = vld [vmem:[%s649] sm:$0x1]
    %v652 = vlaneseq
    %v653 = vshrl.u32 %v652, 7
    %v654 = vsub.s32 0, %v653
    %v655 = vrot.slane %v650, %v654
    %657 = vmatprep.subr.mxu0 0.0
    %658 = vmatpush1.msra.mxu0 %v648
    %659 = vmatprep.subr.mxu0 0.0
    %660 = vmatpush1.msra.mxu0 %v647
    %661 = vmatprep.subr.mxu0 0.0
    %662 = vmatpush1.msra.mxu0 %v646
    %663 = vmatprep.subr.mxu0 0.0
    %664 = vmatpush1.msra.mxu0 %v645
    %665 = vmatprep.subr.mxu0 0.0
    %666 = vmatpush1.msra.mxu0 %v644
    %667 = vmatprep.subr.mxu0 0.0
    %668 = vmatpush1.msra.mxu0 %v643
    %669 = vmatprep.subr.mxu0 0.0
    %670 = vmatpush1.msra.mxu0 %v642
    %671 = vmatprep.subr.mxu0 0.0
    %672 = vmatpush1.msra.mxu0 %v641
    %673 = vmatprep.subr.mxu0 0.0
    %674 = vmatpush1.msra.mxu0 %v640
    %675 = vmatprep.subr.mxu0 0.0
    %676 = vmatpush1.msra.mxu0 %v639
    %677 = vmatprep.subr.mxu0 0.0
    %678 = vmatpush1.msra.mxu0 %v638
    %679 = vmatprep.subr.mxu0 0.0
    %680 = vmatpush1.msra.mxu0 %v637
    %681 = vmatprep.subr.mxu0 0.0
    %682 = vmatpush1.msra.mxu0 %v636
    %683 = vmatprep.subr.mxu0 0.0
    %684 = vmatpush1.msra.mxu0 %v635
    %685 = vmatprep.subr.mxu0 0.0
    %686 = vmatpush1.msra.mxu0 %v634
    %687 = vmatprep.subr.mxu0 0.0
    %688 = vmatpush1.msra.mxu0 %v633
    %689 = vmatprep.subr.mxu0 0.0
    %690 = vmatpush2.msra.mxu0 0.0
    %691 = vmatprep.subr.mxu0 0.0
    %692 = vmatpush2.msra.mxu0 0.0
    %693 = vmatprep.subr.mxu0 0.0
    %694 = vmatpush2.msra.mxu0 0.0
    %695 = vmatprep.subr.mxu0 0.0
    %696 = vmatpush2.msra.mxu0 0.0
    %697 = vmatprep.subr.mxu0 0.0
    %698 = vmatpush2.msra.mxu0 0.0
    %699 = vmatprep.subr.mxu0 0.0
    %700 = vmatpush2.msra.mxu0 0.0
    %701 = vmatprep.subr.mxu0 0.0
    %702 = vmatpush2.msra.mxu0 0.0
    %703 = vmatprep.subr.mxu0 0.0
    %704 = vmatpush2.msra.mxu0 0.0
    %705 = vmatprep.subr.mxu0 0.0
    %706 = vmatpush2.msra.mxu0 0.0
    %707 = vmatprep.subr.mxu0 0.0
    %708 = vmatpush2.msra.mxu0 0.0
    %709 = vmatprep.subr.mxu0 0.0
    %710 = vmatpush2.msra.mxu0 0.0
    %711 = vmatprep.subr.mxu0 0.0
    %712 = vmatpush2.msra.mxu0 0.0
    %713 = vmatprep.subr.mxu0 0.0
    %714 = vmatpush2.msra.mxu0 0.0
    %715 = vmatprep.subr.mxu0 0.0
    %716 = vmatpush2.msra.mxu0 0.0
    %717 = vmatprep.subr.mxu0 0.0
    %718 = vmatpush2.msra.mxu0 0.0
    %719 = vmatprep.subr.mxu0 0.0
    %720 = vmatpush2.msra.mxu0 0.0
    %721 = vmatprep.mubr.f32.mxu0 0.0
    %722 = vmatmul.mubr.f32.gmra.mxu0 %v631
    %v723 = vpop.f32.mrf.mxu0
    %v724 = vadd.f32 %v655, %v723
    %v725 = vpop.f32.mrf.mxu0
    %726 = vdwg.mxu0
    %s727 = scalar_lea.vmem %s2, 6
    %v728 = vld [vmem:[%s727] sm:$0x1]
    %729 = vset.pattern.permute.xlu0 6
    %730 = vperm.xlu0 %729, %v21
    %v731 = vpop.permute.xlu0 %730
    %v734 = vlaneseq
    %v735 = vshrl.u32 %v734, 7
    %v736 = vsub.s32 0, %v735
    %v737 = vrot.slane %v728, %v736
    %v739 = vmul.f32 %v731, %v737
    %s740 = scalar_lea.vmem %s1, 6
    %v741 = vld [vmem:[%s740] sm:$0x1]
    %v743 = vlaneseq
    %v744 = vshrl.u32 %v743, 7
    %v745 = vsub.s32 0, %v744
    %v746 = vrot.slane %v741, %v745
    %v748 = vadd.f32 %v739, %v746
    %v749 = vmax.f32 %v748, 0.0
    %s750 = scalar_lea.vmem %s3, 768
    %v751 = vld [vmem:[%s750] sm:$0xff]
    %v752 = vld [vmem:[%s750 + $0x8] sm:$0xff]
    %v753 = vld [vmem:[%s750 + $0x10] sm:$0xff]
    %v754 = vld [vmem:[%s750 + $0x18] sm:$0xff]
    %v755 = vld [vmem:[%s750 + $0x20] sm:$0xff]
    %v756 = vld [vmem:[%s750 + $0x28] sm:$0xff]
    %v757 = vld [vmem:[%s750 + $0x30] sm:$0xff]
    %v758 = vld [vmem:[%s750 + $0x38] sm:$0xff]
    %v759 = vld [vmem:[%s750 + $0x40] sm:$0xff]
    %v760 = vld [vmem:[%s750 + $0x48] sm:$0xff]
    %v761 = vld [vmem:[%s750 + $0x50] sm:$0xff]
    %v762 = vld [vmem:[%s750 + $0x58] sm:$0xff]
    %v763 = vld [vmem:[%s750 + $0x60] sm:$0xff]
    %v764 = vld [vmem:[%s750 + $0x68] sm:$0xff]
    %v765 = vld [vmem:[%s750 + $0x70] sm:$0xff]
    %v766 = vld [vmem:[%s750 + $0x78] sm:$0xff]
    %s767 = scalar_lea.vmem %s4, 6
    %v768 = vld [vmem:[%s767] sm:$0x1]
    %v770 = vlaneseq
    %v771 = vshrl.u32 %v770, 7
    %v772 = vsub.s32 0, %v771
    %v773 = vrot.slane %v768, %v772
    %775 = vmatprep.subr.mxu0 0.0
    %776 = vmatpush1.msra.mxu0 %v766
    %777 = vmatprep.subr.mxu0 0.0
    %778 = vmatpush1.msra.mxu0 %v765
    %779 = vmatprep.subr.mxu0 0.0
    %780 = vmatpush1.msra.mxu0 %v764
    %781 = vmatprep.subr.mxu0 0.0
    %782 = vmatpush1.msra.mxu0 %v763
    %783 = vmatprep.subr.mxu0 0.0
    %784 = vmatpush1.msra.mxu0 %v762
    %785 = vmatprep.subr.mxu0 0.0
    %786 = vmatpush1.msra.mxu0 %v761
    %787 = vmatprep.subr.mxu0 0.0
    %788 = vmatpush1.msra.mxu0 %v760
    %789 = vmatprep.subr.mxu0 0.0
    %790 = vmatpush1.msra.mxu0 %v759
    %791 = vmatprep.subr.mxu0 0.0
    %792 = vmatpush1.msra.mxu0 %v758
    %793 = vmatprep.subr.mxu0 0.0
    %794 = vmatpush1.msra.mxu0 %v757
    %795 = vmatprep.subr.mxu0 0.0
    %796 = vmatpush1.msra.mxu0 %v756
    %797 = vmatprep.subr.mxu0 0.0
    %798 = vmatpush1.msra.mxu0 %v755
    %799 = vmatprep.subr.mxu0 0.0
    %800 = vmatpush1.msra.mxu0 %v754
    %801 = vmatprep.subr.mxu0 0.0
    %802 = vmatpush1.msra.mxu0 %v753
    %803 = vmatprep.subr.mxu0 0.0
    %804 = vmatpush1.msra.mxu0 %v752
    %805 = vmatprep.subr.mxu0 0.0
    %806 = vmatpush1.msra.mxu0 %v751
    %807 = vmatprep.subr.mxu0 0.0
    %808 = vmatpush2.msra.mxu0 0.0
    %809 = vmatprep.subr.mxu0 0.0
    %810 = vmatpush2.msra.mxu0 0.0
    %811 = vmatprep.subr.mxu0 0.0
    %812 = vmatpush2.msra.mxu0 0.0
    %813 = vmatprep.subr.mxu0 0.0
    %814 = vmatpush2.msra.mxu0 0.0
    %815 = vmatprep.subr.mxu0 0.0
    %816 = vmatpush2.msra.mxu0 0.0
    %817 = vmatprep.subr.mxu0 0.0
    %818 = vmatpush2.msra.mxu0 0.0
    %819 = vmatprep.subr.mxu0 0.0
    %820 = vmatpush2.msra.mxu0 0.0
    %821 = vmatprep.subr.mxu0 0.0
    %822 = vmatpush2.msra.mxu0 0.0
    %823 = vmatprep.subr.mxu0 0.0
    %824 = vmatpush2.msra.mxu0 0.0
    %825 = vmatprep.subr.mxu0 0.0
    %826 = vmatpush2.msra.mxu0 0.0
    %827 = vmatprep.subr.mxu0 0.0
    %828 = vmatpush2.msra.mxu0 0.0
    %829 = vmatprep.subr.mxu0 0.0
    %830 = vmatpush2.msra.mxu0 0.0
    %831 = vmatprep.subr.mxu0 0.0
    %832 = vmatpush2.msra.mxu0 0.0
    %833 = vmatprep.subr.mxu0 0.0
    %834 = vmatpush2.msra.mxu0 0.0
    %835 = vmatprep.subr.mxu0 0.0
    %836 = vmatpush2.msra.mxu0 0.0
    %837 = vmatprep.subr.mxu0 0.0
    %838 = vmatpush2.msra.mxu0 0.0
    %839 = vmatprep.mubr.f32.mxu0 0.0
    %840 = vmatmul.mubr.f32.gmra.mxu0 %v749
    %v841 = vpop.f32.mrf.mxu0
    %v842 = vadd.f32 %v773, %v841
    %v843 = vpop.f32.mrf.mxu0
    %844 = vdwg.mxu0
    %s845 = scalar_lea.vmem %s2, 7
    %v846 = vld [vmem:[%s845] sm:$0x1]
    %847 = vset.pattern.permute.xlu0 7
    %848 = vperm.xlu0 %847, %v21
    %v849 = vpop.permute.xlu0 %848
    %v852 = vlaneseq
    %v853 = vshrl.u32 %v852, 7
    %v854 = vsub.s32 0, %v853
    %v855 = vrot.slane %v846, %v854
    %v857 = vmul.f32 %v849, %v855
    %s858 = scalar_lea.vmem %s1, 7
    %v859 = vld [vmem:[%s858] sm:$0x1]
    %v861 = vlaneseq
    %v862 = vshrl.u32 %v861, 7
    %v863 = vsub.s32 0, %v862
    %v864 = vrot.slane %v859, %v863
    %v866 = vadd.f32 %v857, %v864
    %v867 = vmax.f32 %v866, 0.0
    %s868 = scalar_lea.vmem %s3, 896
    %v869 = vld [vmem:[%s868] sm:$0xff]
    %v870 = vld [vmem:[%s868 + $0x8] sm:$0xff]
    %v871 = vld [vmem:[%s868 + $0x10] sm:$0xff]
    %v872 = vld [vmem:[%s868 + $0x18] sm:$0xff]
    %v873 = vld [vmem:[%s868 + $0x20] sm:$0xff]
    %v874 = vld [vmem:[%s868 + $0x28] sm:$0xff]
    %v875 = vld [vmem:[%s868 + $0x30] sm:$0xff]
    %v876 = vld [vmem:[%s868 + $0x38] sm:$0xff]
    %v877 = vld [vmem:[%s868 + $0x40] sm:$0xff]
    %v878 = vld [vmem:[%s868 + $0x48] sm:$0xff]
    %v879 = vld [vmem:[%s868 + $0x50] sm:$0xff]
    %v880 = vld [vmem:[%s868 + $0x58] sm:$0xff]
    %v881 = vld [vmem:[%s868 + $0x60] sm:$0xff]
    %v882 = vld [vmem:[%s868 + $0x68] sm:$0xff]
    %v883 = vld [vmem:[%s868 + $0x70] sm:$0xff]
    %v884 = vld [vmem:[%s868 + $0x78] sm:$0xff]
    %s885 = scalar_lea.vmem %s4, 7
    %v886 = vld [vmem:[%s885] sm:$0x1]
    %v888 = vlaneseq
    %v889 = vshrl.u32 %v888, 7
    %v890 = vsub.s32 0, %v889
    %v891 = vrot.slane %v886, %v890
    %893 = vmatprep.subr.mxu0 0.0
    %894 = vmatpush1.msra.mxu0 %v884
    %895 = vmatprep.subr.mxu0 0.0
    %896 = vmatpush1.msra.mxu0 %v883
    %897 = vmatprep.subr.mxu0 0.0
    %898 = vmatpush1.msra.mxu0 %v882
    %899 = vmatprep.subr.mxu0 0.0
    %900 = vmatpush1.msra.mxu0 %v881
    %901 = vmatprep.subr.mxu0 0.0
    %902 = vmatpush1.msra.mxu0 %v880
    %903 = vmatprep.subr.mxu0 0.0
    %904 = vmatpush1.msra.mxu0 %v879
    %905 = vmatprep.subr.mxu0 0.0
    %906 = vmatpush1.msra.mxu0 %v878
    %907 = vmatprep.subr.mxu0 0.0
    %908 = vmatpush1.msra.mxu0 %v877
    %909 = vmatprep.subr.mxu0 0.0
    %910 = vmatpush1.msra.mxu0 %v876
    %911 = vmatprep.subr.mxu0 0.0
    %912 = vmatpush1.msra.mxu0 %v875
    %913 = vmatprep.subr.mxu0 0.0
    %914 = vmatpush1.msra.mxu0 %v874
    %915 = vmatprep.subr.mxu0 0.0
    %916 = vmatpush1.msra.mxu0 %v873
    %917 = vmatprep.subr.mxu0 0.0
    %918 = vmatpush1.msra.mxu0 %v872
    %919 = vmatprep.subr.mxu0 0.0
    %920 = vmatpush1.msra.mxu0 %v871
    %921 = vmatprep.subr.mxu0 0.0
    %922 = vmatpush1.msra.mxu0 %v870
    %923 = vmatprep.subr.mxu0 0.0
    %924 = vmatpush1.msra.mxu0 %v869
    %925 = vmatprep.subr.mxu0 0.0
    %926 = vmatpush2.msra.mxu0 0.0
    %927 = vmatprep.subr.mxu0 0.0
    %928 = vmatpush2.msra.mxu0 0.0
    %929 = vmatprep.subr.mxu0 0.0
    %930 = vmatpush2.msra.mxu0 0.0
    %931 = vmatprep.subr.mxu0 0.0
    %932 = vmatpush2.msra.mxu0 0.0
    %933 = vmatprep.subr.mxu0 0.0
    %934 = vmatpush2.msra.mxu0 0.0
    %935 = vmatprep.subr.mxu0 0.0
    %936 = vmatpush2.msra.mxu0 0.0
    %937 = vmatprep.subr.mxu0 0.0
    %938 = vmatpush2.msra.mxu0 0.0
    %939 = vmatprep.subr.mxu0 0.0
    %940 = vmatpush2.msra.mxu0 0.0
    %941 = vmatprep.subr.mxu0 0.0
    %942 = vmatpush2.msra.mxu0 0.0
    %943 = vmatprep.subr.mxu0 0.0
    %944 = vmatpush2.msra.mxu0 0.0
    %945 = vmatprep.subr.mxu0 0.0
    %946 = vmatpush2.msra.mxu0 0.0
    %947 = vmatprep.subr.mxu0 0.0
    %948 = vmatpush2.msra.mxu0 0.0
    %949 = vmatprep.subr.mxu0 0.0
    %950 = vmatpush2.msra.mxu0 0.0
    %951 = vmatprep.subr.mxu0 0.0
    %952 = vmatpush2.msra.mxu0 0.0
    %953 = vmatprep.subr.mxu0 0.0
    %954 = vmatpush2.msra.mxu0 0.0
    %955 = vmatprep.subr.mxu0 0.0
    %956 = vmatpush2.msra.mxu0 0.0
    %957 = vmatprep.mubr.f32.mxu0 0.0
    %958 = vmatmul.mubr.f32.gmra.mxu0 %v867
    %v959 = vpop.f32.mrf.mxu0
    %v960 = vadd.f32 %v891, %v959
    %v961 = vpop.f32.mrf.mxu0
    %962 = vdwg.mxu0
    %964 = vrot.lane.b32.xlu0 %v252, 64
    %v965 = vpop.permute.xlu0 %964
    %968 = vrot.lane.b32.xlu0 %v488, 64
    %v969 = vpop.permute.xlu0 %968
    %972 = vrot.lane.b32.xlu0 %v724, 64
    %v973 = vpop.permute.xlu0 %972
    %976 = vrot.lane.b32.xlu0 %v960, 64
    %v977 = vpop.permute.xlu0 %976
    %vm979 = vcmask 523264
    %v980 = vsel %vm979, %v134, %v965
    %v981 = vsel %vm979, %v370, %v969
    %v982 = vsel %vm979, %v606, %v973
    %v983 = vsel %vm979, %v842, %v977
    %984 = vst [vmem:[#allocation2] sm:$0xff] %v980
    %985 = vst [vmem:[#allocation2 + $0x8] sm:$0xff] %v981
    %986 = vst [vmem:[#allocation2 + $0x10] sm:$0xff] %v982
    %987 = vst [vmem:[#allocation2 + $0x18] sm:$0xff] %v983
    // Predicated region
    $region22: #{tpu_custom_call.1} parent=1 // pred_check
      _
    $region23: #{tpu_custom_call.1} parent=1 // pred_check_branch
      %989 = sbr.rel (0) target = $region25
    $region24: #{tpu_custom_call.1} parent=1 // pred_region
      %s991 = ssub.s32 512, 512
      %992 = vsyncadd [#allocation3], %s991
      %s994 = sshll.u32 [#allocation2], 4
      %s995 = int_to_ptr.vmem [resolvable:$true] %s994
      %997 = dma.vmem_to_hbm [thread:$0]  %s995, 512, %s5, [#allocation3]
    $region25: #{tpu_custom_call.1} parent=1 // pred_fallthru
      _
    // Predicated region
    $region26: #{tpu_custom_call.1} parent=1 // pred_check
      _
    $region27: #{tpu_custom_call.1} parent=1 // pred_check_branch
      %999 = sbr.rel (0) target = $region29
    $region28: #{tpu_custom_call.1} parent=1 // pred_region
      %1000 = dma.done [#allocation3], 512
    $region29: #{tpu_custom_call.1} parent=1 // pred_fallthru
      _
    %1001 = vsyncpa [#allocation3], 1

</llo_original>
